<compile_context>
chip_gen: v7x
topology: tpu7x:2x2x1
jax: 0.10.0
libtpu: 0.0.40
codegen_flags: <defaults>
</compile_context>

<pallas_src>
import functools

import jax
import jax.numpy as jnp
from jax import lax
from jax.experimental import pallas as pl
from jax.experimental.pallas import tpu as pltpu

EPS = 1e-5          # InstanceNorm2d default eps
NEG_SLOPE = 0.2     # LeakyReLU slope
KH = KW = 4
STRIDE = 2
PAD = 1


def _unet_down_kernel(p_ref, w_ref, o_ref, sum_ref, ssq_ref, *, p_valid):
    """One grid step (n, cout_tile, p_tile).

    p_ref : (Kp, tile_p)   im2col tile (MXU dtype), zero-padded in K and P
    w_ref : (tile_c, Kp)   flattened conv weights (MXU dtype), zero-padded K
    o_ref : (tile_c, Pp)   per-(n, cout_tile) output block, resident across
                           the P grid axis; filled tile-by-tile and
                           normalized in place (chunked) at the last P step.
    sum_ref, ssq_ref : (tile_c, 1) f32 streaming per-channel statistics.
    p_valid : number of real (un-padded) spatial positions.  Pad columns of
              the patches are exact zeros, so they contribute nothing to the
              statistics and no masking is required.
    """
    pi = pl.program_id(2)
    num_p = pl.num_programs(2)
    tile_p = p_ref.shape[-1]

    @pl.when(pi == 0)
    def _init():
        sum_ref[...] = jnp.zeros_like(sum_ref)
        ssq_ref[...] = jnp.zeros_like(ssq_ref)

    # Conv tile as a single lane-dense MXU matmul (f32 accumulation).
    y = jnp.dot(w_ref[...], p_ref[...], preferred_element_type=jnp.float32)

    # Single-pass InstanceNorm statistics (f32 accumulators).
    # TODO(synk): for very large P with a large conv-output mean a Welford /
    # per-tile-centered merge would be numerically safer than E[y^2]-E[y]^2.
    sum_ref[...] += jnp.sum(y, axis=1, keepdims=True)
    ssq_ref[...] += jnp.sum(y * y, axis=1, keepdims=True)

    start = pl.multiple_of(pi * tile_p, tile_p)
    o_ref[:, pl.ds(start, tile_p)] = y.astype(o_ref.dtype)

    @pl.when(pi == num_p - 1)
    def _finalize():
        inv_p = 1.0 / p_valid
        mean = sum_ref[...] * inv_p                              # (tile_c, 1)
        var = jnp.maximum(ssq_ref[...] * inv_p - mean * mean, 0.0)
        scale = lax.rsqrt(var + EPS)
        n_chunks = o_ref.shape[-1] // tile_p

        def _norm_chunk(s):
            blk = o_ref[:, pl.ds(s, tile_p)].astype(jnp.float32)
            yn = (blk - mean) * scale
            # LeakyReLU(0.2) as a single VPU max (valid since slope < 1).
            o_ref[:, pl.ds(s, tile_p)] = jnp.maximum(
                yn, NEG_SLOPE * yn).astype(o_ref.dtype)

        if n_chunks <= 4:
            # Short: unroll statically (full scheduler visibility).
            for c in range(n_chunks):
                _norm_chunk(c * tile_p)
        else:
            # Long: chunked loop bounds live ranges / internal scratch (v7x).
            def body(c, carry):
                _norm_chunk(pl.multiple_of(c * tile_p, tile_p))
                return carry
            lax.fori_loop(0, n_chunks, body, 0)


# ----------------------------------------------------------------------------
# Static planning helpers (run at trace time, all-Python).
# ----------------------------------------------------------------------------

def _round_up(x, m):
    return ((x + m - 1) // m) * m


def _pick_tile(total, max_tile, align):
    """Largest tile <= max_tile that divides `total` and is a multiple of
    `align`; falls back to the full extent (always legal for a BlockSpec)."""
    if total <= max_tile:
        return total
    t = (max_tile // align) * align
    while t >= align:
        if total % t == 0:
            return t
        t -= align
    return total


def _vmem_capacity_bytes():
    try:
        info = pltpu.get_tpu_info()
        cap = getattr(info, "vmem_capacity_bytes", None)
        if cap:
            return int(cap)
    except Exception:
        pass
    return 64 * 1024 * 1024          # conservative default (v7x per-core VMEM)


def _plan(n, cout, k, p, in_dtype, out_dtype):
    """Tile / padding / buffering plan.  Returns
    (tile_c, tile_p, k_pad, p_pad, n_buf, vmem_limit_bytes)."""
    in_item = jnp.dtype(in_dtype).itemsize
    out_item = jnp.dtype(out_dtype).itemsize

    vmem_cap = _vmem_capacity_bytes()
    budget = (vmem_cap * 3) // 4        # headroom for compiler-internal scratch

    # K: zero-pad the contraction dim to an MXU-friendly multiple
    # (first layer Cin=3 -> K=48 -> 128).
    k_align = 128 if k <= 256 else (16 if in_item == 2 else 8)
    k_pad = _round_up(k, k_align)

    # Cout tile: packed-sublane aligned (16 for bf16), MXU-native width cap.
    c_align = 16 if in_item == 2 else 8
    tile_c = _pick_tile(cout, 256, c_align)
    # Megacore / v7x (2 TCs): ensure the parallel axes have >= 2 iterations.
    if n == 1 and cout // tile_c < 2:
        half = _pick_tile(cout, max(cout // 2, c_align), c_align)
        if half < cout and cout % half == 0:
            tile_c = half

    # P tile: VMEM-budget- and K-aware, lane-dense (multiple of 128).
    p_pad = _round_up(p, 128)
    n_buf = 3 if (vmem_cap >= 100 * 1024 * 1024 and k_pad <= 1024) else 2
    tile_p = 128
    for cand in range(min(2048, p_pad), 127, -128):
        if p_pad % cand != 0:
            continue
        need = (n_buf * k_pad * cand * in_item       # pipelined input tiles
                + 2 * tile_c * k_pad * in_item       # weight block (2x buffered)
                + 2 * tile_c * p_pad * out_item      # resident output (2x buf.)
                + (2 << 20))                         # misc slack
        if need <= budget:
            tile_p = cand
            break
    num_p = p_pad // tile_p
    if num_p < n_buf:                  # deeper buffering useless / wasteful
        n_buf = 2
    return tile_c, tile_p, k_pad, p_pad, n_buf, budget


def _patch_spec(block_shape, index_map, n_buf):
    """Input BlockSpec, with deeper pipelining for small-K layers when the
    generation's VMEM budget allows (v5e/v6e); plain double-buffer otherwise."""
    if n_buf > 2 and hasattr(pl, "Buffered"):
        try:
            return pl.BlockSpec(block_shape, index_map,
                                pipeline_mode=pl.Buffered(n_buf))
        except TypeError:              # older BlockSpec signature
            pass
    return pl.BlockSpec(block_shape, index_map)


def _im2col_kp(x, mxu_dtype, k_pad, p_pad):
    """x: (N, Cin, H, W) -> zero-padded patches (N, k_pad, p_pad), feature
    index ci*16 + kh*4 + kw (matches weight.reshape(Cout, K)); P = Ho*Wo sits
    on the last (lane) dimension.  Built directly in the MXU dtype."""
    n, c, h, w = x.shape
    ho = (h + 2 * PAD - KH) // STRIDE + 1
    wo = (w + 2 * PAD - KW) // STRIDE + 1
    xp = jnp.pad(x.astype(mxu_dtype), ((0, 0), (0, 0), (PAD, PAD), (PAD, PAD)))
    taps = []
    for kh in range(KH):
        for kw in range(KW):
            taps.append(
                xp[:, :, kh:kh + STRIDE * ho:STRIDE, kw:kw + STRIDE * wo:STRIDE])
    patches = jnp.stack(taps, axis=2)                      # (N, C, 16, Ho, Wo)
    patches = patches.reshape(n, c * KH * KW, ho * wo)     # (N, K, P)
    k, p = c * KH * KW, ho * wo
    if k_pad != k or p_pad != p:
        patches = jnp.pad(patches, ((0, 0), (0, k_pad - k), (0, p_pad - p)))
    return patches, ho, wo


@functools.partial(jax.jit, static_argnames=("mxu_dtype", "out_dtype"))
def unet_down(x, weight, mxu_dtype=jnp.bfloat16, out_dtype=None):
    """x: (N, Cin, H, W), weight: (Cout, Cin, 4, 4) -> (N, Cout, H//2, W//2).

    mxu_dtype : MXU operand dtype (bf16 default; f32 for exact math).
    out_dtype : kernel output / resident-block dtype (default x.dtype; pass
                jnp.bfloat16 to halve VMEM residency and HBM writeback — note
                the pre-norm conv values are then rounded to bf16 before
                normalization).
    """
    n, cin, h, w = x.shape
    cout = weight.shape[0]
    k = cin * KH * KW
    ho = (h + 2 * PAD - KH) // STRIDE + 1
    wo = (w + 2 * PAD - KW) // STRIDE + 1
    p = ho * wo
    odt = jnp.dtype(out_dtype if out_dtype is not None else x.dtype)

    tile_c, tile_p, k_pad, p_pad, n_buf, vmem_limit = _plan(
        n, cout, k, p, jnp.dtype(mxu_dtype), odt)

    patches, _, _ = _im2col_kp(x, mxu_dtype, k_pad, p_pad)   # (N, Kp, Pp)
    w_mat = weight.reshape(cout, k).astype(mxu_dtype)        # (Cout, K)
    if k_pad != k:
        w_mat = jnp.pad(w_mat, ((0, 0), (0, k_pad - k)))

    grid = (n, cout // tile_c, p_pad // tile_p)

    out = pl.pallas_call(
        functools.partial(_unet_down_kernel, p_valid=p),
        out_shape=jax.ShapeDtypeStruct((n, cout, p_pad), odt),
        grid_spec=pltpu.PrefetchScalarGridSpec(
            num_scalar_prefetch=0,
            grid=grid,
            in_specs=[
                _patch_spec((pl.Squeezed(), k_pad, tile_p),
                            lambda ni, j, pi: (ni, 0, pi), n_buf),
                # TODO(synk): the weight block is invariant along n and p;
                # verify Mosaic single-buffers it (budgeted as 2x above).
                pl.BlockSpec((tile_c, k_pad), lambda ni, j, pi: (j, 0)),
            ],
            out_specs=pl.BlockSpec((pl.Squeezed(), tile_c, p_pad),
                                   lambda ni, j, pi: (ni, j, 0)),
            scratch_shapes=[
                pltpu.VMEM((tile_c, 1), jnp.float32),   # sum(y)
                pltpu.VMEM((tile_c, 1), jnp.float32),   # sum(y*y)
            ],
        ),
        compiler_params=pltpu.CompilerParams(
            dimension_semantics=("parallel", "parallel", "arbitrary"),
            vmem_limit_bytes=int(vmem_limit),
        ),
    )(patches, w_mat)

    # (N, Cout, Pp) is already channel-major: drop pad columns, reshape NCHW.
    return out[:, :, :p].reshape(n, cout, ho, wo)


# ----------------------------------------------------------------------------
# Reference + test
# ----------------------------------------------------------------------------

def reference(x, weight):
    """Pure-JAX f32 reference for verification."""
    y = lax.conv_general_dilated(
        x, weight, window_strides=(STRIDE, STRIDE),
        padding=((PAD, PAD), (PAD, PAD)),
        dimension_numbers=("NCHW", "OIHW", "NCHW"),
        precision=lax.Precision.HIGHEST)
    mean = jnp.mean(y, axis=(2, 3), keepdims=True)
    var = jnp.mean((y - mean) ** 2, axis=(2, 3), keepdims=True)
    yn = (y - mean) / jnp.sqrt(var + EPS)
    return jnp.where(yn >= 0, yn, NEG_SLOPE * yn)


def _run_case(key, n, cin, h, w, cout):
    kx, kw = jax.random.split(key)
    x = jax.random.normal(kx, (n, cin, h, w), dtype=jnp.float32)
    fan_in = cin * KH * KW
    weight = jax.random.normal(kw, (cout, cin, KH, KW), dtype=jnp.float32) * (
        1.0 / jnp.sqrt(fan_in))
    ref = reference(x, weight)

    # Exact-math path: f32 MXU operands vs the f32 reference (tight tol).
    out_f32 = jax.block_until_ready(unet_down(x, weight, mxu_dtype=jnp.float32))
    assert out_f32.shape == ref.shape, (out_f32.shape, ref.shape)
    assert jnp.allclose(out_f32, ref, atol=2e-4, rtol=2e-4), float(
        jnp.max(jnp.abs(out_f32 - ref)))

    # Default fast path: bf16 MXU operands, f32 accumulation / statistics.
    out = jax.block_until_ready(unet_down(x, weight))
    assert out.shape == ref.shape, (out.shape, ref.shape)
    assert jnp.allclose(out, ref, atol=5e-2, rtol=5e-2), float(
        jnp.max(jnp.abs(out - ref)))

    # bf16 resident/output block (halves VMEM residency + HBM writeback).
    out_bf16 = jax.block_until_ready(
        unet_down(x, weight, out_dtype=jnp.bfloat16)).astype(jnp.float32)
    assert jnp.allclose(out_bf16, ref, atol=1e-1, rtol=1e-1), float(
        jnp.max(jnp.abs(out_bf16 - ref)))


if __name__ == "__main__":
    key = jax.random.PRNGKey(0)
    k1, k2 = jax.random.split(key)

    # Small shape consistent with the module (batch=2, channels=4, spatial=16).
    _run_case(k1, n=2, cin=4, h=16, w=16, cout=8)
    # Larger shape: exercises multiple lane-dense P tiles, the chunked
    # finalize, and the Cout split that feeds both v7x TensorCores when N==1.
    _run_case(k2, n=1, cin=8, h=128, w=128, cout=32)

    print("KERNEL_OK")
</pallas_src>

<mosaic_0001>
module attributes {stable_mosaic.version = 11 : i64} {
  func.func @_unet_down_kernel(%arg0: i32, %arg1: i32, %arg2: i32, %arg3: memref<1x128x128xf32, #tpu.memory_space<vmem>>, %arg4: memref<8x128xf32, #tpu.memory_space<vmem>>, %arg5: memref<1x8x128xf32, #tpu.memory_space<vmem>>, %arg6: memref<8x1xf32, #tpu.memory_space<vmem>>, %arg7: memref<8x1xf32, #tpu.memory_space<vmem>>) attributes {dimension_semantics = [#tpu.dimension_semantics<parallel>, #tpu.dimension_semantics<parallel>, #tpu.dimension_semantics<arbitrary>], iteration_bounds = array<i64: 2, 1, 1>, scalar_prefetch = 0 : i64, scratch_operands = 2 : i64, tpu.core_type = #tpu.core_type<tc>, window_params = [{transform_indices = @transform_0, window_bounds = array<i64: 1, 128, 128>}, {transform_indices = @transform_1, window_bounds = array<i64: 8, 128>}, {transform_indices = @transform_2, window_bounds = array<i64: 1, 8, 128>}]} {
    %c0_i32 = arith.constant 0 : i32
    %0 = arith.cmpi eq, %arg2, %c0_i32 : i32
    %1 = arith.extui %0 : i1 to i32
    %c0_i32_0 = arith.constant 0 : i32
    %2 = arith.cmpi ne, %1, %c0_i32_0 : i32
    scf.if %2 {
      %cst_19 = arith.constant 0.000000e+00 : f32
      %27 = vector.broadcast %cst_19 : f32 to vector<8x1xf32>
      %c0_20 = arith.constant 0 : index
      %c0_21 = arith.constant 0 : index
      %28 = vector.load %arg6[%c0_20, %c0_21] : memref<8x1xf32, #tpu.memory_space<vmem>>, vector<8x1xf32>
      tpu.vector_store %arg6[%c0_20, %c0_21], %27 {strides = array<i32>} : memref<8x1xf32, #tpu.memory_space<vmem>>, vector<8x1xf32>,
      %cst_22 = arith.constant 0.000000e+00 : f32
      %29 = vector.broadcast %cst_22 : f32 to vector<8x1xf32>
      %c0_23 = arith.constant 0 : index
      %c0_24 = arith.constant 0 : index
      %30 = vector.load %arg7[%c0_23, %c0_24] : memref<8x1xf32, #tpu.memory_space<vmem>>, vector<8x1xf32>
      tpu.vector_store %arg7[%c0_23, %c0_24], %29 {strides = array<i32>} : memref<8x1xf32, #tpu.memory_space<vmem>>, vector<8x1xf32>,
    } else {
    }
    %c0 = arith.constant 0 : index
    %c0_1 = arith.constant 0 : index
    %3 = vector.load %arg4[%c0, %c0_1] : memref<8x128xf32, #tpu.memory_space<vmem>>, vector<8x128xf32>
    %c0_2 = arith.constant 0 : index
    %c0_3 = arith.constant 0 : index
    %c0_4 = arith.constant 0 : index
    %4 = vector.load %arg3[%c0_2, %c0_3, %c0_4] : memref<1x128x128xf32, #tpu.memory_space<vmem>>, vector<1x128x128xf32>
    %5 = vector.shape_cast %4 : vector<1x128x128xf32> to vector<128x128xf32>
    %cst = arith.constant dense<0.000000e+00> : vector<8x128xf32>
    %6 = tpu.matmul %3, %5, %cst {dimension_numbers = #tpu.dot_dimension_numbers<[1], [0], [0], [1], [0, 0, 1, 1], [], []>} : vector<8x128xf32>, vector<128x128xf32>, vector<8x128xf32> -> vector<8x128xf32>
    %c0_5 = arith.constant 0 : index
    %c0_6 = arith.constant 0 : index
    %7 = vector.load %arg6[%c0_5, %c0_6] : memref<8x1xf32, #tpu.memory_space<vmem>>, vector<8x1xf32>
    %cst_7 = arith.constant dense<0.000000e+00> : vector<8xf32>
    %8 = vector.multi_reduction <add>, %6, %cst_7 [1] : vector<8x128xf32> to vector<8xf32>
    %9 = vector.shape_cast %8 : vector<8xf32> to vector<8x1xf32>
    %10 = arith.addf %7, %9 : vector<8x1xf32>
    %c0_8 = arith.constant 0 : index
    %c0_9 = arith.constant 0 : index
    %11 = vector.load %arg6[%c0_8, %c0_9] : memref<8x1xf32, #tpu.memory_space<vmem>>, vector<8x1xf32>
    tpu.vector_store %arg6[%c0_8, %c0_9], %10 {strides = array<i32>} : memref<8x1xf32, #tpu.memory_space<vmem>>, vector<8x1xf32>,
    %c0_10 = arith.constant 0 : index
    %c0_11 = arith.constant 0 : index
    %12 = vector.load %arg7[%c0_10, %c0_11] : memref<8x1xf32, #tpu.memory_space<vmem>>, vector<8x1xf32>
    %13 = arith.mulf %6, %6 : vector<8x128xf32>
    %cst_12 = arith.constant dense<0.000000e+00> : vector<8xf32>
    %14 = vector.multi_reduction <add>, %13, %cst_12 [1] : vector<8x128xf32> to vector<8xf32>
    %15 = vector.shape_cast %14 : vector<8xf32> to vector<8x1xf32>
    %16 = arith.addf %12, %15 : vector<8x1xf32>
    %c0_13 = arith.constant 0 : index
    %c0_14 = arith.constant 0 : index
    %17 = vector.load %arg7[%c0_13, %c0_14] : memref<8x1xf32, #tpu.memory_space<vmem>>, vector<8x1xf32>
    tpu.vector_store %arg7[%c0_13, %c0_14], %16 {strides = array<i32>} : memref<8x1xf32, #tpu.memory_space<vmem>>, vector<8x1xf32>,
    %c128_i32 = arith.constant 128 : i32
    %18 = arith.muli %arg2, %c128_i32 : i32
    %19 = tpu.assume_multiple %18, 128 : i32
    %c0_15 = arith.constant 0 : index
    %c0_16 = arith.constant 0 : index
    %20 = arith.index_cast %19 : i32 to index
    %21 = vector.load %arg5[%c0_15, %c0_16, %20] : memref<1x8x128xf32, #tpu.memory_space<vmem>>, vector<1x8x128xf32>
    %22 = vector.shape_cast %21 : vector<1x8x128xf32> to vector<8x128xf32>
    %23 = vector.shape_cast %6 : vector<8x128xf32> to vector<1x8x128xf32>
    tpu.vector_store %arg5[%c0_15, %c0_16, %20], %23 {strides = array<i32>} : memref<1x8x128xf32, #tpu.memory_space<vmem>>, vector<1x8x128xf32>,
    %c0_i32_17 = arith.constant 0 : i32
    %24 = arith.cmpi eq, %arg2, %c0_i32_17 : i32
    %25 = arith.extui %24 : i1 to i32
    %c0_i32_18 = arith.constant 0 : i32
    %26 = arith.cmpi ne, %25, %c0_i32_18 : i32
    scf.if %26 {
      %c0_19 = arith.constant 0 : index
      %c0_20 = arith.constant 0 : index
      %27 = vector.load %arg6[%c0_19, %c0_20] : memref<8x1xf32, #tpu.memory_space<vmem>>, vector<8x1xf32>
      %cst_21 = arith.constant 1.562500e-02 : f32
      %28 = vector.broadcast %cst_21 : f32 to vector<8x1xf32>
      %29 = arith.mulf %27, %28 : vector<8x1xf32>
      %c0_22 = arith.constant 0 : index
      %c0_23 = arith.constant 0 : index
      %30 = vector.load %arg7[%c0_22, %c0_23] : memref<8x1xf32, #tpu.memory_space<vmem>>, vector<8x1xf32>
      %cst_24 = arith.constant 1.562500e-02 : f32
      %31 = vector.broadcast %cst_24 : f32 to vector<8x1xf32>
      %32 = arith.mulf %30, %31 : vector<8x1xf32>
      %33 = arith.mulf %29, %29 : vector<8x1xf32>
      %34 = arith.subf %32, %33 : vector<8x1xf32>
      %cst_25 = arith.constant 0.000000e+00 : f32
      %35 = vector.broadcast %cst_25 : f32 to vector<8x1xf32>
      %36 = arith.maximumf %34, %35 : vector<8x1xf32>
      %cst_26 = arith.constant 9.99999974E-6 : f32
      %37 = vector.broadcast %cst_26 : f32 to vector<8x1xf32>
      %38 = arith.addf %36, %37 : vector<8x1xf32>
      %39 = math.rsqrt %38 : vector<8x1xf32>
      %c0_27 = arith.constant 0 : index
      %c0_28 = arith.constant 0 : index
      %c0_29 = arith.constant 0 : index
      %40 = vector.load %arg5[%c0_27, %c0_28, %c0_29] : memref<1x8x128xf32, #tpu.memory_space<vmem>>, vector<1x8x128xf32>
      %41 = vector.shape_cast %40 : vector<1x8x128xf32> to vector<8x128xf32>
      %42 = vector.broadcast %29 : vector<8x1xf32> to vector<8x128xf32>
      %43 = arith.subf %41, %42 : vector<8x128xf32>
      %44 = vector.broadcast %39 : vector<8x1xf32> to vector<8x128xf32>
      %45 = arith.mulf %43, %44 : vector<8x128xf32>
      %cst_30 = arith.constant 2.000000e-01 : f32
      %46 = vector.broadcast %cst_30 : f32 to vector<8x128xf32>
      %47 = arith.mulf %46, %45 : vector<8x128xf32>
      %48 = arith.maximumf %45, %47 : vector<8x128xf32>
      %c0_31 = arith.constant 0 : index
      %c0_32 = arith.constant 0 : index
      %c0_33 = arith.constant 0 : index
      %49 = vector.load %arg5[%c0_31, %c0_32, %c0_33] : memref<1x8x128xf32, #tpu.memory_space<vmem>>, vector<1x8x128xf32>
      %50 = vector.shape_cast %49 : vector<1x8x128xf32> to vector<8x128xf32>
      %51 = vector.shape_cast %48 : vector<8x128xf32> to vector<1x8x128xf32>
      tpu.vector_store %arg5[%c0_31, %c0_32, %c0_33], %51 {strides = array<i32>} : memref<1x8x128xf32, #tpu.memory_space<vmem>>, vector<1x8x128xf32>,
    } else {
    }
    return
  }
  func.func @transform_0(%arg0: i32, %arg1: i32, %arg2: i32) -> (i32, i32, i32) {
    %c0_i32 = arith.constant 0 : i32
    %c0_i32_0 = arith.constant 0 : i32
    return %arg0, %c0_i32, %arg2 : i32, i32, i32
  }
  func.func @transform_1(%arg0: i32, %arg1: i32, %arg2: i32) -> (i32, i32) {
    %c0_i32 = arith.constant 0 : i32
    %c0_i32_0 = arith.constant 0 : i32
    return %arg1, %c0_i32 : i32, i32
  }
  func.func @transform_2(%arg0: i32, %arg1: i32, %arg2: i32) -> (i32, i32, i32) {
    %c0_i32 = arith.constant 0 : i32
    %c0_i32_0 = arith.constant 0 : i32
    return %arg0, %arg1, %c0_i32 : i32, i32, i32
  }
}

</mosaic_0001>

<llo_original>
// kernel: unet_down.1
$region0: #{unet_down.1}
  #allocation0 [shape = 'u32[]', space=smem, size = 0x4, offset = 0x4, fixed_abs, tag = 'smem constant byte address 0x4 - core index']
  #allocation1 [shape = 'u32[144,128]{1,0:T(1,128)}', space=vmem, size = 0x12000, scoped, tag = 'internal scratch']
  #allocation2 [shape = 'f32[8,1]{1,0:T(8,128)}', space=vmem, size = 0x1000, scoped, tag = 'scratch operand']
  #allocation3 [shape = 'f32[8,1]{1,0:T(8,128)}', space=vmem, size = 0x1000, scoped, tag = 'scratch operand']
  %s0 = inlined_call_operand.vmem [shape: f32[2,128,128], index: 0, kind: input, shape index: {}]
  %s1 = inlined_call_operand.vmem [shape: f32[8,128], index: 1, kind: input, shape index: {}]
  %s2 = inlined_call_operand.vmem [shape: f32[2,8,128], index: 2, kind: output, shape index: {}]
  %s3 = sld [smem:[#allocation0]]
  $region49: #{unet_down.1} parent=0
    _
  %s5 = ssub.s32 1, %s3
  %s6 = scalar_select 0, %s5, %s3
  loop: start=0, step=1, limit=4
  $region2: #{unet_down.1} parent=0 // loop_pre_header
    _
  $region3: #{unet_down.1} parent=0 // loop_header
    %s8 = sphi 0, %s12
    %p9 = scmp.ge.s32.totalorder %s8, 4
    %s15 = sphi 0, %s34
    %s16 = sphi 0, %s30
    %s17 = sphi 0, %s26
    %s18 = sphi 0, %s15
    %s19 = sphi 0, %s16
    %s20 = sphi 0, %s17
    %s21 = sphi 0, %s18
    %s22 = sphi 0, %s19
    %s23 = sphi 0, %s20
    %s39 = sphi 0, %s41
    %s42 = sphi 0, %s39
    %s43 = sphi 0, %s42
    %s59 = sphi 0, %s43
    %s65 = sphi 0, %s67
    %s68 = sphi 0, %s65
    %s69 = sphi 0, %s68
    %s85 = sphi 0, %s69
    %s93 = sphi 0, %s95
    %s96 = sphi 0, %s93
    %s97 = sphi 0, %s96
    %s113 = sphi 0, %s97
  $region4: #{unet_down.1} parent=0 // loop_header_branch
    %11 = sbr.rel (%p9) target = $region8
  $region5: #{unet_down.1} parent=0 // loop_body
    %s13 = ssub.s32 %s8, 1
    %s14 = ssub.s32 %s8, 2
    %s24 = sadd.s32 1, %s17
    %p25 = scmp.ge.s32.totalorder %s24, 1
    %s26 = scalar_select %p25, 0, %s24
    %s27 = sadd.s32 1, %s16
    %s28 = scalar_select %p25, %s27, %s16
    %p29 = scmp.ge.s32.totalorder %s28, 1
    %s30 = scalar_select %p29, 0, %s28
    %s31 = sadd.s32 1, %s15
    %s32 = scalar_select %p29, %s31, %s15
    %p33 = scmp.ge.s32.totalorder %s32, 2
    %s34 = scalar_select %p33, 0, %s32
    %s35 = ssub.s32 %s15, %s34
    %s36 = ssub.s32 %s17, %s26
    %s37 = sor.u32 %s35, %s36
    %p38 = scmp.eq.s32.totalorder %s37, 0
    %s40 = sadd.s32 %s39, 1
    %s41 = scalar_select %p38, %s39, %s40
    %p44 = pneg %p38
    %p45 = scmp.eq.s32.totalorder %s8, 1
    %p46 = por %p44, %p45
    %p47 = scmp.ne.s32.totalorder %s39, %s42
    %p48 = scmp.eq.s32.totalorder %s8, 0
    %p49 = por %p47, %p48
    %p50 = scmp.ne.s32.totalorder %s39, %s42
    %p51 = scmp.eq.s32.totalorder %s13, 1
    %p52 = por %p50, %p51
    %p53 = scmp.ne.s32.totalorder %s42, %s43
    %p54 = scmp.eq.s32.totalorder %s13, 0
    %p55 = por %p53, %p54
    %p56 = scmp.ne.s32.totalorder %s42, %s43
    %p57 = scmp.eq.s32.totalorder %s14, 1
    %p58 = por %p56, %p57
    %p60 = scmp.ne.s32.totalorder %s43, %s59
    %p61 = scmp.eq.s32.totalorder %s14, 0
    %p62 = por %p60, %p61
    %s63 = ssub.s32 %s16, %s30
    %p64 = scmp.eq.s32.totalorder %s63, 0
    %s66 = sadd.s32 %s65, 1
    %s67 = scalar_select %p64, %s65, %s66
    %p70 = pneg %p64
    %p71 = scmp.eq.s32.totalorder %s8, 1
    %p72 = por %p70, %p71
    %p73 = scmp.ne.s32.totalorder %s65, %s68
    %p74 = scmp.eq.s32.totalorder %s8, 0
    %p75 = por %p73, %p74
    %p76 = scmp.ne.s32.totalorder %s65, %s68
    %p77 = scmp.eq.s32.totalorder %s13, 1
    %p78 = por %p76, %p77
    %p79 = scmp.ne.s32.totalorder %s68, %s69
    %p80 = scmp.eq.s32.totalorder %s13, 0
    %p81 = por %p79, %p80
    %p82 = scmp.ne.s32.totalorder %s68, %s69
    %p83 = scmp.eq.s32.totalorder %s14, 1
    %p84 = por %p82, %p83
    %p86 = scmp.ne.s32.totalorder %s69, %s85
    %p87 = scmp.eq.s32.totalorder %s14, 0
    %p88 = por %p86, %p87
    %s89 = ssub.s32 %s15, %s34
    %s90 = ssub.s32 %s16, %s30
    %s91 = sor.u32 %s89, %s90
    %p92 = scmp.eq.s32.totalorder %s91, 0
    %s94 = sadd.s32 %s93, 1
    %s95 = scalar_select %p92, %s93, %s94
    %p98 = pneg %p92
    %p99 = scmp.eq.s32.totalorder %s8, 1
    %p100 = por %p98, %p99
    %p101 = scmp.ne.s32.totalorder %s93, %s96
    %p102 = scmp.eq.s32.totalorder %s8, 0
    %p103 = por %p101, %p102
    %p104 = scmp.ne.s32.totalorder %s93, %s96
    %p105 = scmp.eq.s32.totalorder %s13, 1
    %p106 = por %p104, %p105
    %p107 = scmp.ne.s32.totalorder %s96, %s97
    %p108 = scmp.eq.s32.totalorder %s13, 0
    %p109 = por %p107, %p108
    %p110 = scmp.ne.s32.totalorder %s96, %s97
    %p111 = scmp.eq.s32.totalorder %s14, 1
    %p112 = por %p110, %p111
    %p114 = scmp.ne.s32.totalorder %s97, %s113
    %p115 = scmp.eq.s32.totalorder %s14, 0
    %p116 = por %p114, %p115
    %p117 = scmp.le.s32.totalorder 1, %s8
    %p118 = scmp.lt.s32.totalorder %s8, 3
    %p119 = pnand %p117, %p118
    %p120 = pneg %p119
    // Predicated region
    $region9: #{unet_down.1} parent=5 // pred_check
      _
    $region10: #{unet_down.1} parent=5 // pred_check_branch
      %122 = sbr.rel (%p119) target = $region12
    $region11: #{unet_down.1} parent=5 // pred_region
      %s123 = ssub.s32 %s8, 1
      // Predicated region
      $region13: #{unet_down.1} parent=11 // pred_check
        %p124 = pneg %p81
      $region14: #{unet_down.1} parent=11 // pred_check_branch
        %126 = sbr.rel (%p124) target = $region16
      $region15: #{unet_down.1} parent=11 // pred_region
        %p127 = scmp.lt.s32.totalorder %s19, 0
        %s128 = scalar_select %p127, %s19, 0
        %s129 = smul.addr %s128, 8
        %s130 = scalar_lea.vmem %s1, %s129
      $region16: #{unet_down.1} parent=11 // pred_fallthru
        _
    $region12: #{unet_down.1} parent=5 // pred_fallthru
      _
    %p131 = scmp.lt.s32.totalorder %s8, 2
    // Predicated region
    $region17: #{unet_down.1} parent=5 // pred_check
      %p132 = pneg %p131
    $region18: #{unet_down.1} parent=5 // pred_check_branch
      %134 = sbr.rel (%p132) target = $region20
    $region19: #{unet_down.1} parent=5 // pred_region
      // Predicated region
      $region21: #{unet_down.1} parent=19 // pred_check
        %p135 = pneg %p49
      $region22: #{unet_down.1} parent=19 // pred_check_branch
        %137 = sbr.rel (%p135) target = $region24
      $region23: #{unet_down.1} parent=19 // pred_region
        %p138 = scmp.lt.s32.totalorder %s15, 1
        %s139 = scalar_select %p138, %s15, 1
        %p140 = scmp.lt.s32.totalorder %s17, 0
        %s141 = scalar_select %p140, %s17, 0
        %s142 = smul.addr %s139, 16
        %s143 = sadd.s32 %s141, %s142
        %s144 = smul.addr %s143, 8
        %s145 = scalar_lea.vmem %s0, %s144
      $region24: #{unet_down.1} parent=19 // pred_fallthru
        _
    $region20: #{unet_down.1} parent=5 // pred_fallthru
      _
    %p146 = scmp.le.s32.totalorder 1, %s8
    %p147 = scmp.lt.s32.totalorder %s8, 3
    %p148 = pnand %p146, %p147
    %p149 = pneg %p148
    // Predicated region
    $region25: #{unet_down.1} parent=5 // pred_check
      _
    $region26: #{unet_down.1} parent=5 // pred_check_branch
      %151 = sbr.rel (%p148) target = $region28
    $region27: #{unet_down.1} parent=5 // pred_region
      %s152 = ssub.s32 %s8, 1
      %p153 = scmp.lt.s32.totalorder %s18, 1
      %s154 = scalar_select %p153, %s18, 1
      %p155 = scmp.lt.s32.totalorder %s20, 0
      %s156 = scalar_select %p155, %s20, 0
      %s157 = smul.addr %s154, 16
      %s158 = sadd.s32 %s156, %s157
      %s159 = smul.addr %s158, 8
      %s160 = scalar_lea.vmem %s0, %s159
      %p161 = pneg %p55
      %p162 = pneg %p52
      %p163 = scmp.lt.s32.totalorder %s19, 0
      %s164 = scalar_select %p163, %s19, 0
      %s165 = smul.addr %s164, 8
      %s166 = scalar_lea.vmem %s1, %s165
      %p167 = pneg %p81
      %p168 = pneg %p78
      %p169 = pneg %p109
      %p170 = pneg %p106
      %p171 = scmp.lt.s32.totalorder %s18, 1
      %s172 = scalar_select %p171, %s18, 1
      %p173 = scmp.lt.s32.totalorder %s19, 0
      %s174 = scalar_select %p173, %s19, 0
      %s175 = sadd.s32 %s174, %s172
      %s176 = smul.addr %s175, 8
      %s177 = scalar_lea.vmem %s2, %s176
      %p178 = scmp.lt.s32.totalorder %s18, 1
      %s179 = scalar_select %p178, %s18, 1
      %p180 = scmp.lt.s32.totalorder %s20, 0
      %s181 = scalar_select %p180, %s20, 0
      %s182 = smul.addr %s179, 16
      %s183 = sadd.s32 %s181, %s182
      %s184 = smul.addr %s183, 8
      %s185 = scalar_lea.vmem %s0, %s184
      %p186 = scmp.lt.s32.totalorder %s19, 0
      %s187 = scalar_select %p186, %s19, 0
      %s188 = smul.addr %s187, 8
      %s189 = scalar_lea.vmem %s1, %s188
      %p190 = scmp.lt.s32.totalorder %s18, 1
      %s191 = scalar_select %p190, %s18, 1
      %p192 = scmp.lt.s32.totalorder %s19, 0
      %s193 = scalar_select %p192, %s19, 0
      %s194 = sadd.s32 %s193, %s191
      %s195 = smul.addr %s194, 8
      %s196 = scalar_lea.vmem %s2, %s195
      %p197 = scmp.eq.s32.totalorder %s20, 0
      // Predicated region
      $region29: #{unet_down.1} parent=27 // pred_check
        %p198 = pneg %p197
      $region30: #{unet_down.1} parent=27 // pred_check_branch
        %200 = sbr.rel (%p198) target = $region32
      $region31: #{unet_down.1} parent=27 // pred_region
        %vm201 = vcmask 7168
        %202 = vst.msk [vmem:[#allocation2] sm:$0xff] %vm201, 0.0
        %203 = vst.msk [vmem:[#allocation3] sm:$0xff] %vm201, 0.0
      $region32: #{unet_down.1} parent=27 // pred_fallthru
        _
      %v204 = vld [vmem:[%s189] sm:$0xff]
      %v205 = vld [vmem:[%s185] sm:$0xff]
      %v206 = vld [vmem:[%s185 + $0x8] sm:$0xff]
      %v207 = vld [vmem:[%s185 + $0x10] sm:$0xff]
      %v208 = vld [vmem:[%s185 + $0x18] sm:$0xff]
      %v209 = vld [vmem:[%s185 + $0x20] sm:$0xff]
      %v210 = vld [vmem:[%s185 + $0x28] sm:$0xff]
      %v211 = vld [vmem:[%s185 + $0x30] sm:$0xff]
      %v212 = vld [vmem:[%s185 + $0x38] sm:$0xff]
      %v213 = vld [vmem:[%s185 + $0x40] sm:$0xff]
      %v214 = vld [vmem:[%s185 + $0x48] sm:$0xff]
      %v215 = vld [vmem:[%s185 + $0x50] sm:$0xff]
      %v216 = vld [vmem:[%s185 + $0x58] sm:$0xff]
      %v217 = vld [vmem:[%s185 + $0x60] sm:$0xff]
      %v218 = vld [vmem:[%s185 + $0x68] sm:$0xff]
      %v219 = vld [vmem:[%s185 + $0x70] sm:$0xff]
      %v220 = vld [vmem:[%s185 + $0x78] sm:$0xff]
      %221 = vmatprep.subr.mxu0 0.0
      %222 = vmatpush1.msra.mxu0 %v205
      %223 = vmatprep.subr.mxu0 0.0
      %224 = vmatpush1.msra.mxu0 %v206
      %225 = vmatprep.subr.mxu0 0.0
      %226 = vmatpush1.msra.mxu0 %v207
      %227 = vmatprep.subr.mxu0 0.0
      %228 = vmatpush1.msra.mxu0 %v208
      %229 = vmatprep.subr.mxu0 0.0
      %230 = vmatpush1.msra.mxu0 %v209
      %231 = vmatprep.subr.mxu0 0.0
      %232 = vmatpush1.msra.mxu0 %v210
      %233 = vmatprep.subr.mxu0 0.0
      %234 = vmatpush1.msra.mxu0 %v211
      %235 = vmatprep.subr.mxu0 0.0
      %236 = vmatpush1.msra.mxu0 %v212
      %237 = vmatprep.subr.mxu0 0.0
      %238 = vmatpush1.msra.mxu0 %v213
      %239 = vmatprep.subr.mxu0 0.0
      %240 = vmatpush1.msra.mxu0 %v214
      %241 = vmatprep.subr.mxu0 0.0
      %242 = vmatpush1.msra.mxu0 %v215
      %243 = vmatprep.subr.mxu0 0.0
      %244 = vmatpush1.msra.mxu0 %v216
      %245 = vmatprep.subr.mxu0 0.0
      %246 = vmatpush1.msra.mxu0 %v217
      %247 = vmatprep.subr.mxu0 0.0
      %248 = vmatpush1.msra.mxu0 %v218
      %249 = vmatprep.subr.mxu0 0.0
      %250 = vmatpush1.msra.mxu0 %v219
      %251 = vmatprep.subr.mxu0 0.0
      %252 = vmatpush1.msra.mxu0 %v220
      %253 = vmatprep.subr.mxu0 0.0
      %254 = vmatpush1.msra.mxu0 0.0
      %255 = vmatprep.subr.mxu0 0.0
      %256 = vmatpush1.msra.mxu0 0.0
      %257 = vmatprep.subr.mxu0 0.0
      %258 = vmatpush1.msra.mxu0 0.0
      %259 = vmatprep.subr.mxu0 0.0
      %260 = vmatpush1.msra.mxu0 0.0
      %261 = vmatprep.subr.mxu0 0.0
      %262 = vmatpush1.msra.mxu0 0.0
      %263 = vmatprep.subr.mxu0 0.0
      %264 = vmatpush1.msra.mxu0 0.0
      %265 = vmatprep.subr.mxu0 0.0
      %266 = vmatpush1.msra.mxu0 0.0
      %267 = vmatprep.subr.mxu0 0.0
      %268 = vmatpush1.msra.mxu0 0.0
      %269 = vmatprep.subr.mxu0 0.0
      %270 = vmatpush1.msra.mxu0 0.0
      %271 = vmatprep.subr.mxu0 0.0
      %272 = vmatpush1.msra.mxu0 0.0
      %273 = vmatprep.subr.mxu0 0.0
      %274 = vmatpush1.msra.mxu0 0.0
      %275 = vmatprep.subr.mxu0 0.0
      %276 = vmatpush1.msra.mxu0 0.0
      %277 = vmatprep.subr.mxu0 0.0
      %278 = vmatpush1.msra.mxu0 0.0
      %279 = vmatprep.subr.mxu0 0.0
      %280 = vmatpush1.msra.mxu0 0.0
      %281 = vmatprep.subr.mxu0 0.0
      %282 = vmatpush1.msra.mxu0 0.0
      %283 = vmatprep.subr.mxu0 0.0
      %284 = vmatpush1.msra.mxu0 0.0
      %285 = vmatprep.mubr.f32.mxu0 0.0
      %286 = vmatmul.mubr.f32.gmra.mrb[0].mxu0 %v204
      %v287 = vpop.f32.mrb[0].mxu0
      %v288 = vadd.f32 0.0, %v287
      %v289 = vpop.f32.mrb[0].mxu0
      %290 = vdwg.mxu0
      %v291 = vld [vmem:[#allocation2] sm:$0xff]
      %292 = vadd.xlane.f32.xlu0 %v288
      %v293 = vpop.xlane.xlu0 %292
      %v294 = vadd.f32 %v291, %v293
      %vm295 = vcmask 7168
      %296 = vst.msk [vmem:[#allocation2] sm:$0xff] %vm295, %v294
      %v297 = vld [vmem:[#allocation3] sm:$0xff]
      %v298 = vmul.f32 %v288, %v288
      %299 = vadd.xlane.f32.xlu0 %v298
      %v300 = vpop.xlane.xlu0 %299
      %v301 = vadd.f32 %v297, %v300
      %302 = vst.msk [vmem:[#allocation3] sm:$0xff] %vm295, %v301
      %s303 = smul.u32 %s20, 128
      %s304 = sshra.s32 %s303, 7
      %s305 = sand.u32 %s303, 127
      %s306 = scalar_lea.vmem %s196, %s304
      %307 = vst [vmem:[%s306] sm:$0xff] %v288
      // Predicated region
      $region33: #{unet_down.1} parent=27 // pred_check
        %p308 = pneg %p197
      $region34: #{unet_down.1} parent=27 // pred_check_branch
        %310 = sbr.rel (%p308) target = $region36
      $region35: #{unet_down.1} parent=27 // pred_region
        %v311 = vld [vmem:[#allocation2] sm:$0xff]
        %v312 = vmul.f32 %v311, 0.015625
        %v313 = vld [vmem:[#allocation3] sm:$0xff]
        %v314 = vmul.f32 %v313, 0.015625
        %v315 = vmul.f32 %v312, %v312
        %v316 = vsub.f32 %v314, %v315
        %v317 = vmax.f32 %v316, 0.0
        %v318 = vadd.f32 %v317, 1e-05
        %v319 = vrsqrt.pop %v318
        %v320 = vld [vmem:[%s196] sm:$0xff]
        %322 = vset.pattern.permute.xlu0 0
        %323 = vperm.xlu0 %322, %v312
        %v324 = vpop.permute.xlu0 %323
        %v326 = vsub.f32 %v320, %v324
        %328 = vset.pattern.permute.xlu0 0
        %329 = vperm.xlu0 %328, %v319
        %v330 = vpop.permute.xlu0 %329
        %v332 = vmul.f32 %v326, %v330
        %v333 = vmul.f32 %v332, 0.2
        %v334 = vmax.f32 %v332, %v333
        %335 = vst [vmem:[%s196] sm:$0xff] %v334
      $region36: #{unet_down.1} parent=27 // pred_fallthru
        _
      %p336 = scmp.lt.s32.totalorder %s18, 1
      %s337 = scalar_select %p336, %s18, 1
      %p338 = scmp.lt.s32.totalorder %s19, 0
      %s339 = scalar_select %p338, %s19, 0
      %s340 = sadd.s32 %s339, %s337
      %s341 = smul.addr %s340, 8
      %s342 = scalar_lea.vmem %s2, %s341
      // Predicated region
      $region37: #{unet_down.1} parent=27 // pred_check
        %p343 = pneg %p106
      $region38: #{unet_down.1} parent=27 // pred_check_branch
        %345 = sbr.rel (%p343) target = $region40
      $region39: #{unet_down.1} parent=27 // pred_region
        _
      $region40: #{unet_down.1} parent=27 // pred_fallthru
        _
    $region28: #{unet_down.1} parent=5 // pred_fallthru
      _
    %p346 = scmp.le.s32.totalorder 2, %s8
    // Predicated region
    $region41: #{unet_down.1} parent=5 // pred_check
      %p347 = pneg %p346
    $region42: #{unet_down.1} parent=5 // pred_check_branch
      %349 = sbr.rel (%p347) target = $region44
    $region43: #{unet_down.1} parent=5 // pred_region
      %s350 = ssub.s32 %s8, 2
      // Predicated region
      $region45: #{unet_down.1} parent=43 // pred_check
        %p351 = pneg %p112
      $region46: #{unet_down.1} parent=43 // pred_check_branch
        %353 = sbr.rel (%p351) target = $region48
      $region47: #{unet_down.1} parent=43 // pred_region
        %p354 = scmp.lt.s32.totalorder %s21, 1
        %s355 = scalar_select %p354, %s21, 1
        %p356 = scmp.lt.s32.totalorder %s22, 0
        %s357 = scalar_select %p356, %s22, 0
        %s358 = sadd.s32 %s357, %s355
        %s359 = smul.addr %s358, 8
        %s360 = scalar_lea.vmem %s2, %s359
      $region48: #{unet_down.1} parent=43 // pred_fallthru
        _
    $region44: #{unet_down.1} parent=5 // pred_fallthru
      _
  $region6: #{unet_down.1} parent=0 // loop_footer
    %s12 = sadd.s32 1, %s8
  $region7: #{unet_down.1} parent=0 // loop_footer_branch
    %7 = sbr.rel target = $region3
  $region8: #{unet_down.1} parent=0 // loop_exit
    _

</llo_original>
